<compile_context>
chip_gen: v6e
topology: v6e:2x2x1
jax: 0.10.0
libtpu: 0.0.40
codegen_flags: <defaults>
</compile_context>

<pallas_src>
import numpy as np
import jax
import jax.numpy as jnp
from jax.experimental import pallas as pl
from jax.experimental.pallas import tpu as pltpu


def _round_up(x: int, m: int) -> int:
    return ((x + m - 1) // m) * m


# ----------------------------------------------------------------------------
# Deterministic chroma filterbank (librosa.filters.chroma re-implemented in numpy).
# ----------------------------------------------------------------------------
def chroma_filterbank(sr: int, n_fft: int, n_chroma: int = 12, tuning: float = 0.0) -> np.ndarray:
    frequencies = np.linspace(0, sr, n_fft, endpoint=False)[1:]
    a440 = 440.0 * 2.0 ** (tuning / n_chroma)
    frqbins = n_chroma * np.log2(frequencies / (a440 / 16.0))
    frqbins = np.concatenate(([frqbins[0] - 1.5 * n_chroma], frqbins))
    binwidthbins = np.concatenate((np.maximum(frqbins[1:] - frqbins[:-1], 1.0), [1.0]))
    D = np.subtract.outer(frqbins, np.arange(0, n_chroma, dtype="d")).T
    n_chroma2 = np.round(float(n_chroma) / 2)
    D = np.remainder(D + n_chroma2 + 10 * n_chroma, n_chroma) - n_chroma2
    wts = np.exp(-0.5 * (2 * D / np.tile(binwidthbins, (n_chroma, 1))) ** 2)
    wts = wts / np.maximum(np.sqrt(np.sum(wts ** 2, axis=0, keepdims=True)), 1e-30)
    ctroct, octwidth = 5.0, 2.0
    wts *= np.tile(np.exp(-0.5 * (((frqbins / n_chroma - ctroct) / octwidth) ** 2)), (n_chroma, 1))
    wts = np.roll(wts, -3 * (n_chroma // 12), axis=0)
    return np.ascontiguousarray(wts[:, : int(1 + n_fft / 2)], dtype=np.float32)


# ----------------------------------------------------------------------------
# Pallas kernel: fused (windowed-DFT matmul) -> power -> chroma matmul -> inf-norm.
# Grid: (row_tiles, k_tiles), k (frequency / re+im columns) is the reduction axis.
# ----------------------------------------------------------------------------
def _chroma_kernel(frames_ref, basis_ref, fb_ref, out_ref, acc_ref):
    kt = pl.program_id(1)

    @pl.when(kt == 0)
    def _():
        acc_ref[...] = jnp.zeros_like(acc_ref)

    # Windowed DFT columns (re | -sin packed together) for this K tile.
    spec = jnp.dot(frames_ref[...], basis_ref[...], preferred_element_type=jnp.float32)
    # Power spectrum contribution; chroma projection is linear so re/im columns
    # are just summed through duplicated filterbank rows.
    power = (spec * spec).astype(fb_ref.dtype)
    acc_ref[...] += jnp.dot(power, fb_ref[...], preferred_element_type=jnp.float32)

    @pl.when(kt == pl.num_programs(1) - 1)
    def _():
        chroma = acc_ref[...]
        denom = jnp.maximum(jnp.max(jnp.abs(chroma), axis=-1, keepdims=True), 1e-6)
        out_ref[...] = chroma * pl.reciprocal(denom, approx=True)


class ChromaExtractor:
    """JAX/Pallas port of audiocraft ChromaExtractor (power=2, normalized, center=True)."""

    MAX_TILE_R = 256   # row (frame) tile size cap
    ROW_ALIGN = 16     # bf16 sublane quantum
    MAX_KTILE = 512    # frequency-column tile cap (multiple of 128)

    def __init__(self, sample_rate, n_chroma=12, radix2_exp=5, nfft=None,
                 winlen=None, winhop=None, argmax=False):
        self.winlen = winlen or 2 ** radix2_exp
        self.nfft = nfft or self.winlen
        self.winhop = winhop or self.winlen // 4
        self.sample_rate = sample_rate
        self.n_chroma = n_chroma
        self.argmax = argmax
        self.n_freq = self.nfft // 2 + 1

        F = self.n_freq
        two_f = 2 * F
        k_aligned = _round_up(two_f, 128)
        self.KTILE = k_aligned if k_aligned <= self.MAX_KTILE else self.MAX_KTILE
        self.Kcols = _round_up(two_f, self.KTILE)
        self.CPAD = _round_up(max(self.n_chroma, 1), 128)

        # periodic Hann window (torch.hann_window default), centered zero-pad to nfft
        win = 0.5 * (1.0 - np.cos(2.0 * np.pi * np.arange(self.winlen) / self.winlen))
        if self.winlen < self.nfft:
            lp = (self.nfft - self.winlen) // 2
            win = np.pad(win, (lp, self.nfft - self.winlen - lp))
        win = win.astype(np.float64)
        inv_win_energy = 1.0 / np.sum(win * win)   # torchaudio normalized=True

        # Packed windowed DFT basis: [cos | -sin] columns, window folded in.
        n = np.arange(self.nfft)[:, None]
        k = np.arange(F)[None, :]
        ang = 2.0 * np.pi * n * k / self.nfft
        basis = np.zeros((self.nfft, self.Kcols), np.float32)
        basis[:, :F] = (np.cos(ang) * win[:, None]).astype(np.float32)
        basis[:, F:two_f] = (-np.sin(ang) * win[:, None]).astype(np.float32)

        # Chroma filterbank, rows duplicated for the re/im column halves, with the
        # 1/sum(win^2) normalization folded in, lane-padded to 128 chroma columns.
        fb = chroma_filterbank(sample_rate, self.nfft, n_chroma=n_chroma)  # (C, F)
        fb_big = np.zeros((self.Kcols, self.CPAD), np.float32)
        fb_big[:F, :n_chroma] = fb.T * inv_win_energy
        fb_big[F:two_f, :n_chroma] = fb.T * inv_win_energy

        self.basis_f32 = jnp.asarray(basis)
        self.fb_f32 = jnp.asarray(fb_big)
        self.basis = self.basis_f32.astype(jnp.bfloat16)
        self.fb_big = self.fb_f32.astype(jnp.bfloat16)

    # ---- glue: waveform -> flattened frame rows (host/JAX side) -------------
    def _frames(self, wav):
        if wav.ndim == 3:           # (B, 1, T) like the torch module (squeeze(1))
            wav = wav[:, 0, :]
        B, T = wav.shape
        if T < self.nfft:           # circular pad as in the torch forward
            pad = self.nfft - T
            r = 0 if pad % 2 == 0 else 1
            left, right = pad // 2, pad // 2 + r
            wav = jnp.concatenate([wav[:, T - left:], wav, wav[:, :right]], axis=-1)
            T = self.nfft
        # torch.stft(center=True) reflect pad of nfft//2 on both sides
        wav_p = jnp.pad(wav, ((0, 0), (self.nfft // 2, self.nfft // 2)), mode="reflect")
        n_frames = 1 + (wav_p.shape[-1] - self.nfft) // self.winhop
        idx = self.winhop * np.arange(n_frames)[:, None] + np.arange(self.nfft)[None, :]
        frames = wav_p[:, idx]                                    # (B, n_frames, nfft)
        frames2d = frames.reshape(B * n_frames, self.nfft).astype(jnp.float32)
        rows = frames2d.shape[0]
        # large lane/MXU-friendly row tiles; pad rows (zeros normalize to 0, sliced off)
        tile_r = min(self.MAX_TILE_R, _round_up(rows, self.ROW_ALIGN))
        rows_padded = _round_up(rows, tile_r)
        if rows_padded != rows:
            frames2d = jnp.pad(frames2d, ((0, rows_padded - rows), (0, 0)))
        return frames2d, B, n_frames, rows, tile_r

    # ---- Pallas forward ------------------------------------------------------
    def forward(self, wav):
        frames2d, B, n_frames, rows, tile_r = self._frames(wav)
        frames_bf16 = frames2d.astype(jnp.bfloat16)
        R = frames_bf16.shape[0]
        NF, C = self.nfft, self.n_chroma
        KT, KC, CP = self.KTILE, self.Kcols, self.CPAD

        out = pl.pallas_call(
            _chroma_kernel,
            out_shape=jax.ShapeDtypeStruct((R, CP), jnp.float32),
            grid=(R // tile_r, KC // KT),
            in_specs=[
                pl.BlockSpec((tile_r, NF), lambda i, k: (i, 0)),
                pl.BlockSpec((NF, KT), lambda i, k: (0, k)),
                pl.BlockSpec((KT, CP), lambda i, k: (k, 0)),
            ],
            out_specs=pl.BlockSpec((tile_r, CP), lambda i, k: (i, 0)),
            scratch_shapes=[pltpu.VMEM((tile_r, CP), jnp.float32)],
            compiler_params=pltpu.CompilerParams(
                dimension_semantics=("parallel", "arbitrary"),
                vmem_limit_bytes=48 * 1024 * 1024,
            ),
        )(frames_bf16, self.basis, self.fb_big)

        chroma = out[:rows, :C].reshape(B, n_frames, C)           # (b, t, d) like torch output
        if self.argmax:
            # TODO(synk): in-place scatter_ of the torch argmax branch is emulated
            # with jax.nn.one_hot in glue rather than inside the kernel.
            idx = jnp.argmax(chroma, axis=-1)
            chroma = jax.nn.one_hot(idx, C, dtype=chroma.dtype)
        return chroma

    # ---- pure-JAX f32 reference (same math, no Pallas) -----------------------
    def forward_ref(self, wav):
        frames2d, B, n_frames, rows, _ = self._frames(wav)
        spec = frames2d @ self.basis_f32
        chroma = (spec * spec) @ self.fb_f32
        denom = jnp.maximum(jnp.max(jnp.abs(chroma), axis=-1, keepdims=True), 1e-6)
        chroma = (chroma / denom)[:rows, :self.n_chroma].reshape(B, n_frames, self.n_chroma)
        if self.argmax:
            idx = jnp.argmax(chroma, axis=-1)
            chroma = jax.nn.one_hot(idx, self.n_chroma, dtype=chroma.dtype)
        return chroma


if __name__ == "__main__":
    # Small-shape config consistent with the module: nfft=winlen=2**5=32, hop=8.
    ext = ChromaExtractor(sample_rate=800, n_chroma=12, radix2_exp=5, argmax=False)

    key = jax.random.PRNGKey(0)
    B, C_in, T = 2, 1, 64
    wav = jax.random.normal(key, (B, C_in, T), dtype=jnp.float32)

    out = jax.block_until_ready(ext.forward(wav))
    ref = jax.block_until_ready(ext.forward_ref(wav))

    assert out.shape == (B, 1 + T // ext.winhop, ext.n_chroma), out.shape
    # bf16 MXU inputs + approx reciprocal -> relaxed tolerance vs f32 reference.
    np.testing.assert_allclose(np.asarray(out), np.asarray(ref), rtol=5e-2, atol=5e-2)

    print("KERNEL_OK")
</pallas_src>

<mosaic_0001>
module attributes {stable_mosaic.version = 11 : i64} {
  func.func @_chroma_kernel(%arg0: i32, %arg1: i32, %arg2: memref<32x32xbf16, #tpu.memory_space<vmem>>, %arg3: memref<32x128xbf16, #tpu.memory_space<vmem>>, %arg4: memref<128x128xbf16, #tpu.memory_space<vmem>>, %arg5: memref<32x128xf32, #tpu.memory_space<vmem>>, %arg6: memref<32x128xf32, #tpu.memory_space<vmem>>) attributes {dimension_semantics = [#tpu.dimension_semantics<parallel>, #tpu.dimension_semantics<arbitrary>], iteration_bounds = array<i64: 1, 1>, scalar_prefetch = 0 : i64, scratch_operands = 1 : i64, tpu.core_type = #tpu.core_type<tc>, window_params = [{transform_indices = @transform_0, window_bounds = array<i64: 32, 32>}, {transform_indices = @transform_1, window_bounds = array<i64: 32, 128>}, {transform_indices = @transform_2, window_bounds = array<i64: 128, 128>}, {transform_indices = @transform_3, window_bounds = array<i64: 32, 128>}]} {
    %c0_i32 = arith.constant 0 : i32
    %0 = arith.cmpi eq, %arg1, %c0_i32 : i32
    %1 = arith.extui %0 : i1 to i32
    %c0_i32_0 = arith.constant 0 : i32
    %2 = arith.cmpi ne, %1, %c0_i32_0 : i32
    scf.if %2 {
      %cst_13 = arith.constant 0.000000e+00 : f32
      %16 = vector.broadcast %cst_13 : f32 to vector<32x128xf32>
      %c0_14 = arith.constant 0 : index
      %c0_15 = arith.constant 0 : index
      %17 = vector.load %arg6[%c0_14, %c0_15] : memref<32x128xf32, #tpu.memory_space<vmem>>, vector<32x128xf32>
      tpu.vector_store %arg6[%c0_14, %c0_15], %16 {strides = array<i32>} : memref<32x128xf32, #tpu.memory_space<vmem>>, vector<32x128xf32>,
    } else {
    }
    %c0 = arith.constant 0 : index
    %c0_1 = arith.constant 0 : index
    %3 = vector.load %arg2[%c0, %c0_1] : memref<32x32xbf16, #tpu.memory_space<vmem>>, vector<32x32xbf16>
    %c0_2 = arith.constant 0 : index
    %c0_3 = arith.constant 0 : index
    %4 = vector.load %arg3[%c0_2, %c0_3] : memref<32x128xbf16, #tpu.memory_space<vmem>>, vector<32x128xbf16>
    %cst = arith.constant dense<0.000000e+00> : vector<32x128xf32>
    %5 = tpu.matmul %3, %4, %cst {dimension_numbers = #tpu.dot_dimension_numbers<[1], [0], [0], [1], [0, 0, 1, 1], [], []>} : vector<32x32xbf16>, vector<32x128xbf16>, vector<32x128xf32> -> vector<32x128xf32>
    %6 = arith.mulf %5, %5 : vector<32x128xf32>
    %7 = arith.truncf %6 : vector<32x128xf32> to vector<32x128xbf16>
    %c0_4 = arith.constant 0 : index
    %c0_5 = arith.constant 0 : index
    %8 = vector.load %arg6[%c0_4, %c0_5] : memref<32x128xf32, #tpu.memory_space<vmem>>, vector<32x128xf32>
    %c0_6 = arith.constant 0 : index
    %c0_7 = arith.constant 0 : index
    %9 = vector.load %arg4[%c0_6, %c0_7] : memref<128x128xbf16, #tpu.memory_space<vmem>>, vector<128x128xbf16>
    %cst_8 = arith.constant dense<0.000000e+00> : vector<32x128xf32>
    %10 = tpu.matmul %7, %9, %cst_8 {dimension_numbers = #tpu.dot_dimension_numbers<[1], [0], [0], [1], [0, 0, 1, 1], [], []>} : vector<32x128xbf16>, vector<128x128xbf16>, vector<32x128xf32> -> vector<32x128xf32>
    %11 = arith.addf %8, %10 : vector<32x128xf32>
    %c0_9 = arith.constant 0 : index
    %c0_10 = arith.constant 0 : index
    %12 = vector.load %arg6[%c0_9, %c0_10] : memref<32x128xf32, #tpu.memory_space<vmem>>, vector<32x128xf32>
    tpu.vector_store %arg6[%c0_9, %c0_10], %11 {strides = array<i32>} : memref<32x128xf32, #tpu.memory_space<vmem>>, vector<32x128xf32>,
    %c0_i32_11 = arith.constant 0 : i32
    %13 = arith.cmpi eq, %arg1, %c0_i32_11 : i32
    %14 = arith.extui %13 : i1 to i32
    %c0_i32_12 = arith.constant 0 : i32
    %15 = arith.cmpi ne, %14, %c0_i32_12 : i32
    scf.if %15 {
      %c0_13 = arith.constant 0 : index
      %c0_14 = arith.constant 0 : index
      %16 = vector.load %arg6[%c0_13, %c0_14] : memref<32x128xf32, #tpu.memory_space<vmem>>, vector<32x128xf32>
      %17 = math.absf %16 : vector<32x128xf32>
      %cst_15 = arith.constant dense<0xFF800000> : vector<32xf32>
      %18 = vector.multi_reduction <maximumf>, %17, %cst_15 [1] : vector<32x128xf32> to vector<32xf32>
      %19 = vector.shape_cast %18 : vector<32xf32> to vector<32x1xf32>
      %cst_16 = arith.constant 9.99999997E-7 : f32
      %20 = vector.broadcast %cst_16 : f32 to vector<32x1xf32>
      %21 = arith.maximumf %19, %20 : vector<32x1xf32>
      %22 = tpu.reciprocal %21 {approx = true} : vector<32x1xf32> -> vector<32x1xf32>
      %23 = vector.broadcast %22 : vector<32x1xf32> to vector<32x128xf32>
      %24 = arith.mulf %16, %23 : vector<32x128xf32>
      %c0_17 = arith.constant 0 : index
      %c0_18 = arith.constant 0 : index
      %25 = vector.load %arg5[%c0_17, %c0_18] : memref<32x128xf32, #tpu.memory_space<vmem>>, vector<32x128xf32>
      tpu.vector_store %arg5[%c0_17, %c0_18], %24 {strides = array<i32>} : memref<32x128xf32, #tpu.memory_space<vmem>>, vector<32x128xf32>,
    } else {
    }
    return
  }
  func.func @transform_0(%arg0: i32, %arg1: i32) -> (i32, i32) {
    %c0_i32 = arith.constant 0 : i32
    %c0_i32_0 = arith.constant 0 : i32
    return %arg0, %c0_i32 : i32, i32
  }
  func.func @transform_1(%arg0: i32, %arg1: i32) -> (i32, i32) {
    %c0_i32 = arith.constant 0 : i32
    %c0_i32_0 = arith.constant 0 : i32
    return %c0_i32, %arg1 : i32, i32
  }
  func.func @transform_2(%arg0: i32, %arg1: i32) -> (i32, i32) {
    %c0_i32 = arith.constant 0 : i32
    %c0_i32_0 = arith.constant 0 : i32
    return %arg1, %c0_i32 : i32, i32
  }
  func.func @transform_3(%arg0: i32, %arg1: i32) -> (i32, i32) {
    %c0_i32 = arith.constant 0 : i32
    %c0_i32_0 = arith.constant 0 : i32
    return %arg0, %c0_i32 : i32, i32
  }
}

</mosaic_0001>

<llo_original>
// kernel: tpu_custom_call.1
$region0: #{tpu_custom_call.1}
  #allocation0 [shape = 'u32[]', space=smem, size = 0x4, offset = 0x4, fixed_abs, tag = 'smem constant byte address 0x4 - core index']
  #allocation1 [shape = 'u32[144,128]{1,0:T(1,128)}', space=vmem, size = 0x12000, scoped, tag = 'internal scratch']
  #allocation2 [shape = 'f32[32,128]{1,0:T(8,128)}', space=vmem, size = 0x4000, scoped, tag = 'scratch operand']
  %s0 = inlined_call_operand.hbm [shape: bf16[32,32], index: 0, kind: input, shape index: {}]
  %s1 = inlined_call_operand.hbm [shape: bf16[32,128], index: 1, kind: input, shape index: {}]
  %s2 = inlined_call_operand.hbm [shape: bf16[128,128], index: 2, kind: input, shape index: {}]
  %s3 = inlined_call_operand.hbm [shape: f32[32,128], index: 3, kind: output, shape index: {}]
  %s4 = sld [smem:[#allocation0]]
  $region42: #{tpu_custom_call.1} parent=0
    _
  %s6 = ssub.s32 1, %s4
  %s7 = scalar_select 0, %s6, %s4
  $region1: #{tpu_custom_call.1} parent=0
    #allocation3 [shape = 'u8[8192]{0}', space=vmem, size = 0x2000, scoped, tag = 'input window, operand 0, single buffered']
    #allocation4 [shape = 's32[1]{0}', space=sflag, size = 0x4, scoped, tag = 'scoped memory for tpu_custom_call.1']
    #allocation5 [shape = 's32[1]{0}', space=sflag, size = 0x4, scoped, tag = 'scoped memory for tpu_custom_call.1']
    #allocation6 [shape = 'u8[8192]{0}', space=vmem, size = 0x2000, scoped, tag = 'input window, operand 1, single buffered']
    #allocation7 [shape = 's32[1]{0}', space=sflag, size = 0x4, scoped, tag = 'scoped memory for tpu_custom_call.1']
    #allocation8 [shape = 'u8[32768]{0}', space=vmem, size = 0x8000, scoped, tag = 'input window, operand 2, single buffered']
    #allocation9 [shape = 'u8[16384]{0}', space=vmem, size = 0x4000, scoped, tag = 'output window, operand 0, single buffered']
    %8 = vsyncpa [#allocation4], 0
    %9 = vsyncpa [#allocation7], 0
    %10 = vsyncpa [#allocation5], 0
    // Predicated region
    $region2: #{tpu_custom_call.1} parent=1 // pred_check
      _
    $region3: #{tpu_custom_call.1} parent=1 // pred_check_branch
      %12 = sbr.rel (0) target = $region5
    $region4: #{tpu_custom_call.1} parent=1 // pred_region
      %s14 = ssub.s32 256, 256
      %15 = vsyncadd [#allocation4], %s14
      %s16 = sshll.u32 [#allocation3], 4
      %s17 = int_to_ptr.vmem [resolvable:$true] %s16
      %22 = dma.hbm_to_vmem [thread:$0]  %s0, 256, %s17, [#allocation4], 64, 64, 4
    $region5: #{tpu_custom_call.1} parent=1 // pred_fallthru
      _
    // Predicated region
    $region6: #{tpu_custom_call.1} parent=1 // pred_check
      _
    $region7: #{tpu_custom_call.1} parent=1 // pred_check_branch
      %24 = sbr.rel (0) target = $region9
    $region8: #{tpu_custom_call.1} parent=1 // pred_region
      %s26 = ssub.s32 256, 256
      %27 = vsyncadd [#allocation7], %s26
      %s28 = sshll.u32 [#allocation6], 4
      %s29 = int_to_ptr.vmem [resolvable:$true] %s28
      %34 = dma.hbm_to_vmem [thread:$0]  %s1, 256, %s29, [#allocation7], 64, 64, 4
    $region9: #{tpu_custom_call.1} parent=1 // pred_fallthru
      _
    // Predicated region
    $region10: #{tpu_custom_call.1} parent=1 // pred_check
      _
    $region11: #{tpu_custom_call.1} parent=1 // pred_check_branch
      %36 = sbr.rel (0) target = $region13
    $region12: #{tpu_custom_call.1} parent=1 // pred_region
      %s38 = ssub.s32 1024, 1024
      %39 = vsyncadd [#allocation7], %s38
      %s40 = sshll.u32 [#allocation8], 4
      %s41 = int_to_ptr.vmem [resolvable:$true] %s40
      %46 = dma.hbm_to_vmem [thread:$0]  %s2, 1024, %s41, [#allocation7], 64, 64, 4
    $region13: #{tpu_custom_call.1} parent=1 // pred_fallthru
      _
    // Predicated region
    $region14: #{tpu_custom_call.1} parent=1 // pred_check
      _
    $region15: #{tpu_custom_call.1} parent=1 // pred_check_branch
      %48 = sbr.rel (0) target = $region17
    $region16: #{tpu_custom_call.1} parent=1 // pred_region
      %49 = dma.done [#allocation4], 256
    $region17: #{tpu_custom_call.1} parent=1 // pred_fallthru
      _
    // Predicated region
    $region18: #{tpu_custom_call.1} parent=1 // pred_check
      _
    $region19: #{tpu_custom_call.1} parent=1 // pred_check_branch
      %51 = sbr.rel (0) target = $region21
    $region20: #{tpu_custom_call.1} parent=1 // pred_region
      %52 = dma.done [#allocation7], 256
    $region21: #{tpu_custom_call.1} parent=1 // pred_fallthru
      _
    // Predicated region
    $region22: #{tpu_custom_call.1} parent=1 // pred_check
      _
    $region23: #{tpu_custom_call.1} parent=1 // pred_check_branch
      %54 = sbr.rel (0) target = $region25
    $region24: #{tpu_custom_call.1} parent=1 // pred_region
      %55 = dma.done [#allocation7], 1024
    $region25: #{tpu_custom_call.1} parent=1 // pred_fallthru
      _
    %p57 = scmp.eq.s32.totalorder 0, 0
    // Predicated region
    $region26: #{tpu_custom_call.1} parent=1 // pred_check
      %p58 = pneg %p57
    $region27: #{tpu_custom_call.1} parent=1 // pred_check_branch
      %60 = sbr.rel (%p58) target = $region29
    $region28: #{tpu_custom_call.1} parent=1 // pred_region
      %61 = vst [vmem:[#allocation2] sm:$0xff] 0.0
      %62 = vst [vmem:[#allocation2 + $0x8] sm:$0xff] 0.0
      %63 = vst [vmem:[#allocation2 + $0x10] sm:$0xff] 0.0
      %64 = vst [vmem:[#allocation2 + $0x18] sm:$0xff] 0.0
    $region29: #{tpu_custom_call.1} parent=1 // pred_fallthru
      _
    %v65 = vld [vmem:[#allocation3] sm:$0xf]
    %v66 = vld [vmem:[#allocation3 + $0x4] sm:$0xf]
    %v67 = vld [vmem:[#allocation3 + $0x8] sm:$0xf]
    %v68 = vld [vmem:[#allocation3 + $0xc] sm:$0xf]
    %v69 = vld [vmem:[#allocation6] sm:$0xf]
    %v70 = vld [vmem:[#allocation6 + $0x4] sm:$0xf]
    %v71 = vld [vmem:[#allocation6 + $0x8] sm:$0xf]
    %v72 = vld [vmem:[#allocation6 + $0xc] sm:$0xf]
    %v77 = vunpack.c.l.b16 %v65
    %v78 = vunpack.c.l.b16 %v66
    %v79 = vunpack.c.l.b16 %v67
    %v80 = vunpack.c.l.b16 %v68
    %v81 = vpack.c.b16 %v78, %v77
    %v82 = vpack.c.b16 %v80, %v79
    %v87 = vunpack.c.l.b16 %v69
    %v88 = vunpack.c.l.b16 %v70
    %v89 = vunpack.c.l.b16 %v71
    %v90 = vunpack.c.l.b16 %v72
    %v91 = vpack.c.b16 %v88, %v87
    %v92 = vpack.c.b16 %v90, %v89
    %vm95 = vcmask 261120
    %v97 = vsel %vm95, %v81, 0
    %v100 = vsel %vm95, %v82, 0
    %102 = vmatprep.subr.bf16.mxu0 0
    %103 = vmatpush1.bf16.msra.mxu0 0
    %104 = vmatprep.subr.bf16.mxu0 0
    %105 = vmatpush1.bf16.msra.mxu0 0
    %106 = vmatprep.subr.bf16.mxu0 0
    %107 = vmatpush1.bf16.msra.mxu0 0
    %108 = vmatprep.subr.bf16.mxu0 0
    %109 = vmatpush1.bf16.msra.mxu0 0
    %110 = vmatprep.subr.bf16.mxu0 0
    %111 = vmatpush1.bf16.msra.mxu0 0
    %112 = vmatprep.subr.bf16.mxu0 0
    %113 = vmatpush1.bf16.msra.mxu0 0
    %114 = vmatprep.subr.bf16.mxu0 0
    %115 = vmatpush1.bf16.msra.mxu0 %v92
    %116 = vmatprep.subr.bf16.mxu0 0
    %117 = vmatpush1.bf16.msra.mxu0 %v91
    %118 = vmatprep.subr.bf16.mxu0 0
    %119 = vmatpush2.bf16.msra.mxu0 0
    %120 = vmatprep.subr.bf16.mxu0 0
    %121 = vmatpush2.bf16.msra.mxu0 0
    %122 = vmatprep.subr.bf16.mxu0 0
    %123 = vmatpush2.bf16.msra.mxu0 0
    %124 = vmatprep.subr.bf16.mxu0 0
    %125 = vmatpush2.bf16.msra.mxu0 0
    %126 = vmatprep.subr.bf16.mxu0 0
    %127 = vmatpush2.bf16.msra.mxu0 0
    %128 = vmatprep.subr.bf16.mxu0 0
    %129 = vmatpush2.bf16.msra.mxu0 0
    %130 = vmatprep.subr.bf16.mxu0 0
    %131 = vmatpush2.bf16.msra.mxu0 0
    %132 = vmatprep.subr.bf16.mxu0 0
    %133 = vmatpush2.bf16.msra.mxu0 0
    %134 = vmatprep.mubr.bf16.mxu0 0
    %135 = vmatmul.mubr.bf16.gmra.mxu0 %v97
    %v136 = vpop.f32.mrf.mxu0
    %v137 = vadd.f32 0.0, %v136
    %v138 = vpop.f32.mrf.mxu0
    %v139 = vpop.f32.mrf.mxu0
    %v140 = vadd.f32 0.0, %v139
    %v141 = vpop.f32.mrf.mxu0
    %142 = vmatprep.mubr.bf16.mxu0 0
    %143 = vmatmul.mubr.bf16.gmra.mxu0 %v100
    %v144 = vpop.f32.mrf.mxu0
    %v145 = vadd.f32 0.0, %v144
    %v146 = vpop.f32.mrf.mxu0
    %v147 = vpop.f32.mrf.mxu0
    %v148 = vadd.f32 0.0, %v147
    %v149 = vpop.f32.mrf.mxu0
    %150 = vdwg.mxu0
    %v151 = vmul.f32 %v137, %v137
    %v152 = vmul.f32 %v140, %v140
    %v153 = vmul.f32 %v145, %v145
    %v154 = vmul.f32 %v148, %v148
    %v155 = vpack.c.bf16 %v152, %v151
    %v156 = vpack.c.bf16 %v154, %v153
    %v157 = vld [vmem:[#allocation2] sm:$0xff]
    %v158 = vld [vmem:[#allocation2 + $0x8] sm:$0xff]
    %v159 = vld [vmem:[#allocation2 + $0x10] sm:$0xff]
    %v160 = vld [vmem:[#allocation2 + $0x18] sm:$0xff]
    %v161 = vld [vmem:[#allocation8] sm:$0xf]
    %v162 = vld [vmem:[#allocation8 + $0x4] sm:$0xf]
    %v163 = vld [vmem:[#allocation8 + $0x8] sm:$0xf]
    %v164 = vld [vmem:[#allocation8 + $0xc] sm:$0xf]
    %v165 = vld [vmem:[#allocation8 + $0x10] sm:$0xf]
    %v166 = vld [vmem:[#allocation8 + $0x14] sm:$0xf]
    %v167 = vld [vmem:[#allocation8 + $0x18] sm:$0xf]
    %v168 = vld [vmem:[#allocation8 + $0x1c] sm:$0xf]
    %v169 = vld [vmem:[#allocation8 + $0x20] sm:$0xf]
    %v170 = vld [vmem:[#allocation8 + $0x24] sm:$0xf]
    %v171 = vld [vmem:[#allocation8 + $0x28] sm:$0xf]
    %v172 = vld [vmem:[#allocation8 + $0x2c] sm:$0xf]
    %v173 = vld [vmem:[#allocation8 + $0x30] sm:$0xf]
    %v174 = vld [vmem:[#allocation8 + $0x34] sm:$0xf]
    %v175 = vld [vmem:[#allocation8 + $0x38] sm:$0xf]
    %v176 = vld [vmem:[#allocation8 + $0x3c] sm:$0xf]
    %v193 = vunpack.c.l.b16 %v161
    %v194 = vunpack.c.l.b16 %v162
    %v195 = vunpack.c.l.b16 %v163
    %v196 = vunpack.c.l.b16 %v164
    %v197 = vunpack.c.l.b16 %v165
    %v198 = vunpack.c.l.b16 %v166
    %v199 = vunpack.c.l.b16 %v167
    %v200 = vunpack.c.l.b16 %v168
    %v201 = vunpack.c.l.b16 %v169
    %v202 = vunpack.c.l.b16 %v170
    %v203 = vunpack.c.l.b16 %v171
    %v204 = vunpack.c.l.b16 %v172
    %v205 = vunpack.c.l.b16 %v173
    %v206 = vunpack.c.l.b16 %v174
    %v207 = vunpack.c.l.b16 %v175
    %v208 = vunpack.c.l.b16 %v176
    %v209 = vpack.c.b16 %v194, %v193
    %v210 = vpack.c.b16 %v196, %v195
    %v211 = vpack.c.b16 %v198, %v197
    %v212 = vpack.c.b16 %v200, %v199
    %v213 = vpack.c.b16 %v202, %v201
    %v214 = vpack.c.b16 %v204, %v203
    %v215 = vpack.c.b16 %v206, %v205
    %v216 = vpack.c.b16 %v208, %v207
    %225 = vmatprep.subr.bf16.mxu0 0
    %226 = vmatpush1.bf16.msra.mxu0 %v216
    %227 = vmatprep.subr.bf16.mxu0 0
    %228 = vmatpush1.bf16.msra.mxu0 %v215
    %229 = vmatprep.subr.bf16.mxu0 0
    %230 = vmatpush1.bf16.msra.mxu0 %v214
    %231 = vmatprep.subr.bf16.mxu0 0
    %232 = vmatpush1.bf16.msra.mxu0 %v213
    %233 = vmatprep.subr.bf16.mxu0 0
    %234 = vmatpush1.bf16.msra.mxu0 %v212
    %235 = vmatprep.subr.bf16.mxu0 0
    %236 = vmatpush1.bf16.msra.mxu0 %v211
    %237 = vmatprep.subr.bf16.mxu0 0
    %238 = vmatpush1.bf16.msra.mxu0 %v210
    %239 = vmatprep.subr.bf16.mxu0 0
    %240 = vmatpush1.bf16.msra.mxu0 %v209
    %241 = vmatprep.subr.bf16.mxu0 0
    %242 = vmatpush2.bf16.msra.mxu0 0
    %243 = vmatprep.subr.bf16.mxu0 0
    %244 = vmatpush2.bf16.msra.mxu0 0
    %245 = vmatprep.subr.bf16.mxu0 0
    %246 = vmatpush2.bf16.msra.mxu0 0
    %247 = vmatprep.subr.bf16.mxu0 0
    %248 = vmatpush2.bf16.msra.mxu0 0
    %249 = vmatprep.subr.bf16.mxu0 0
    %250 = vmatpush2.bf16.msra.mxu0 0
    %251 = vmatprep.subr.bf16.mxu0 0
    %252 = vmatpush2.bf16.msra.mxu0 0
    %253 = vmatprep.subr.bf16.mxu0 0
    %254 = vmatpush2.bf16.msra.mxu0 0
    %255 = vmatprep.subr.bf16.mxu0 0
    %256 = vmatpush2.bf16.msra.mxu0 0
    %257 = vmatprep.mubr.bf16.mxu0 0
    %258 = vmatmul.mubr.bf16.gmra.mxu0 %v155
    %v259 = vpop.f32.mrf.mxu0
    %v260 = vadd.f32 0.0, %v259
    %v261 = vpop.f32.mrf.mxu0
    %v262 = vpop.f32.mrf.mxu0
    %v263 = vadd.f32 0.0, %v262
    %v264 = vpop.f32.mrf.mxu0
    %265 = vmatprep.mubr.bf16.mxu0 0
    %266 = vmatmul.mubr.bf16.gmra.mxu0 %v156
    %v267 = vpop.f32.mrf.mxu0
    %v268 = vadd.f32 0.0, %v267
    %v269 = vpop.f32.mrf.mxu0
    %v270 = vpop.f32.mrf.mxu0
    %v271 = vadd.f32 0.0, %v270
    %v272 = vpop.f32.mrf.mxu0
    %273 = vdwg.mxu0
    %v274 = vadd.f32 %v157, %v260
    %v275 = vadd.f32 %v158, %v263
    %v276 = vadd.f32 %v159, %v268
    %v277 = vadd.f32 %v160, %v271
    %278 = vst [vmem:[#allocation2] sm:$0xff] %v274
    %279 = vst [vmem:[#allocation2 + $0x8] sm:$0xff] %v275
    %280 = vst [vmem:[#allocation2 + $0x10] sm:$0xff] %v276
    %281 = vst [vmem:[#allocation2 + $0x18] sm:$0xff] %v277
    // Predicated region
    $region30: #{tpu_custom_call.1} parent=1 // pred_check
      %p282 = pneg %p57
    $region31: #{tpu_custom_call.1} parent=1 // pred_check_branch
      %284 = sbr.rel (%p282) target = $region33
    $region32: #{tpu_custom_call.1} parent=1 // pred_region
      %v285 = vld [vmem:[#allocation2] sm:$0xff]
      %v286 = vld [vmem:[#allocation2 + $0x8] sm:$0xff]
      %v287 = vld [vmem:[#allocation2 + $0x10] sm:$0xff]
      %v288 = vld [vmem:[#allocation2 + $0x18] sm:$0xff]
      %v289 = vand.u32 2147483647, %v285
      %v290 = vand.u32 2147483647, %v286
      %v291 = vand.u32 2147483647, %v287
      %v292 = vand.u32 2147483647, %v288
      %293 = vmax.xlane.f32.xlu0 %v289
      %v294 = vpop.xlane.xlu0 %293
      %295 = vmax.xlane.f32.xlu0 %v290
      %v296 = vpop.xlane.xlu0 %295
      %297 = vmax.xlane.f32.xlu0 %v291
      %v298 = vpop.xlane.xlu0 %297
      %299 = vmax.xlane.f32.xlu0 %v292
      %v300 = vpop.xlane.xlu0 %299
      %v301 = vmax.f32 %v294, 1e-06
      %v302 = vmax.f32 %v296, 1e-06
      %v303 = vmax.f32 %v298, 1e-06
      %v304 = vmax.f32 %v300, 1e-06
      %v305 = vrcp.pop %v301
      %v306 = vrcp.pop %v302
      %v307 = vrcp.pop %v303
      %v308 = vrcp.pop %v304
      %v309 = vmul.f32 %v285, %v305
      %v310 = vmul.f32 %v286, %v306
      %v311 = vmul.f32 %v287, %v307
      %v312 = vmul.f32 %v288, %v308
      %313 = vst [vmem:[#allocation9] sm:$0xff] %v309
      %314 = vst [vmem:[#allocation9 + $0x8] sm:$0xff] %v310
      %315 = vst [vmem:[#allocation9 + $0x10] sm:$0xff] %v311
      %316 = vst [vmem:[#allocation9 + $0x18] sm:$0xff] %v312
    $region33: #{tpu_custom_call.1} parent=1 // pred_fallthru
      _
    // Predicated region
    $region34: #{tpu_custom_call.1} parent=1 // pred_check
      _
    $region35: #{tpu_custom_call.1} parent=1 // pred_check_branch
      %318 = sbr.rel (0) target = $region37
    $region36: #{tpu_custom_call.1} parent=1 // pred_region
      %s320 = ssub.s32 512, 512
      %321 = vsyncadd [#allocation5], %s320
      %s322 = sshll.u32 [#allocation9], 4
      %s323 = int_to_ptr.vmem [resolvable:$true] %s322
      %328 = dma.vmem_to_hbm [thread:$0]  %s323, 512, %s3, [#allocation5], 128, 128, 8
    $region37: #{tpu_custom_call.1} parent=1 // pred_fallthru
      _
    // Predicated region
    $region38: #{tpu_custom_call.1} parent=1 // pred_check
      _
    $region39: #{tpu_custom_call.1} parent=1 // pred_check_branch
      %330 = sbr.rel (0) target = $region41
    $region40: #{tpu_custom_call.1} parent=1 // pred_region
      %331 = dma.done [#allocation5], 512
    $region41: #{tpu_custom_call.1} parent=1 // pred_fallthru
      _
    %332 = vsyncpa [#allocation4], 1
    %333 = vsyncpa [#allocation7], 1
    %334 = vsyncpa [#allocation5], 1

</llo_original>
